<compile_context>
chip_gen: v6e
topology: v6e:2x2x1
jax: 0.10.0
libtpu: 0.0.40
codegen_flags: <defaults>
</compile_context>

<pallas_src>
import jax
import jax.numpy as jnp
from jax.experimental import pallas as pl
from jax.experimental.pallas import tpu as pltpu

LANE = 128
TARGET_BLOCK_BYTES = 2 * 1024 * 1024  # ~2 MiB blocks: near HBM roofline, VMEM-safe


def _copy_kernel(x_ref, o_ref):
    # Identity copy of the current VMEM tile.
    o_ref[...] = x_ref[...]


def _pick_cols(total, max_cols=16 * LANE):
    """Largest multiple of 128 that divides `total`, capped at `max_cols`.

    Returns None if `total` is not a multiple of 128 (ragged fallback)."""
    if total % LANE != 0:
        return None
    c = max_cols
    while c >= LANE:
        if total % c == 0:
            return c
        c -= LANE
    return LANE


def pallas_reshape(x, s0, s1):
    """Equivalent of torch `x.view(-1, s0, s1)` for a contiguous tensor."""
    total = x.size
    assert total % (s0 * s1) == 0, "total elements must be divisible by s0*s1"
    lead = total // (s0 * s1)

    itemsize = jnp.dtype(x.dtype).itemsize
    # dtype-aware sublane minimum: f32 -> 8, bf16 -> 16, int8/fp8 -> 32
    sublane = {4: 8, 2: 16, 1: 32}.get(itemsize, 8)

    # ---- choose a lane-dense flat 2D slab (rows, cols) ----------------------
    cols = _pick_cols(total)
    if cols is not None:
        rows = total // cols
    else:
        # Ragged total (not a multiple of 128): single logical row, chunk the
        # lane dim below (no whole-array-in-one-block fallback).
        rows, cols = 1, total
    flat = x.reshape(rows, cols)

    # ---- lane (last-dim) tiling ---------------------------------------------
    if cols % LANE == 0:
        block_cols = cols  # already capped at 2048 lanes by _pick_cols
    else:
        ragged_chunk = max(LANE, (TARGET_BLOCK_BYTES // itemsize) // LANE * LANE)
        block_cols = cols if cols <= ragged_chunk else ragged_chunk

    # ---- sublane (row) tiling: fixed aligned tile + cdiv grid ---------------
    row_bytes = block_cols * itemsize
    tgt_rows = max(sublane, (TARGET_BLOCK_BYTES // row_bytes) // sublane * sublane)
    block_rows = rows if tgt_rows >= rows else tgt_rows  # full dim or sublane-aligned

    grid = (pl.cdiv(rows, block_rows), pl.cdiv(cols, block_cols))

    out_flat = pl.pallas_call(
        _copy_kernel,
        out_shape=jax.ShapeDtypeStruct((rows, cols), x.dtype),
        grid_spec=pltpu.PrefetchScalarGridSpec(
            num_scalar_prefetch=0,
            grid=grid,
            in_specs=[pl.BlockSpec((block_rows, block_cols), lambda i, j: (i, j))],
            out_specs=pl.BlockSpec((block_rows, block_cols), lambda i, j: (i, j)),
        ),
        # Output shares the input buffer: no second HBM allocation; under jit
        # with a donated input the copy can be elided entirely.
        input_output_aliases={0: 0},
        cost_estimate=pl.CostEstimate(
            flops=0,
            transcendentals=0,
            bytes_accessed=2 * total * itemsize,
        ),
        compiler_params=pltpu.CompilerParams(
            dimension_semantics=("parallel", "parallel"),
            vmem_limit_bytes=32 * 1024 * 1024,
        ),
    )(flat)

    # Glue: apply the target view shape (same row-major flat ordering).
    return out_flat.reshape(lead, s0, s1)


if __name__ == "__main__":
    # Module configured as Reshape(8, 32); input (2, 4, 16, 16) -> 2048 elems
    # -> output shape (2048 // (8*32), 8, 32) = (8, 8, 32).
    s0, s1 = 8, 32
    key = jax.random.PRNGKey(0)
    x = jax.random.normal(key, (2, 4, 16, 16), dtype=jnp.float32)

    # Reference computed first (plain row-major reshape == torch .view).
    ref = x.reshape(-1, s0, s1)

    out = pallas_reshape(x, s0, s1)
    out = jax.block_until_ready(out)

    assert out.shape == (x.size // (s0 * s1), s0, s1), out.shape
    assert out.dtype == x.dtype
    assert bool(jnp.all(out == ref))

    print("KERNEL_OK")
</pallas_src>

<mosaic_0001>
module attributes {stable_mosaic.version = 11 : i64} {
  func.func @_copy_kernel(%arg0: i32, %arg1: i32, %arg2: memref<1x2048xf32, #tpu.memory_space<vmem>>, %arg3: memref<1x2048xf32, #tpu.memory_space<vmem>>) attributes {dimension_semantics = [#tpu.dimension_semantics<parallel>, #tpu.dimension_semantics<parallel>], iteration_bounds = array<i64: 1, 1>, scalar_prefetch = 0 : i64, scratch_operands = 0 : i64, tpu.core_type = #tpu.core_type<tc>, window_params = [{transform_indices = @transform_0, window_bounds = array<i64: 1, 2048>}, {transform_indices = @transform_1, window_bounds = array<i64: 1, 2048>}]} {
    %c0 = arith.constant 0 : index
    %c0_0 = arith.constant 0 : index
    %0 = vector.load %arg2[%c0, %c0_0] : memref<1x2048xf32, #tpu.memory_space<vmem>>, vector<1x2048xf32>
    %c0_1 = arith.constant 0 : index
    %c0_2 = arith.constant 0 : index
    %1 = vector.load %arg3[%c0_1, %c0_2] : memref<1x2048xf32, #tpu.memory_space<vmem>>, vector<1x2048xf32>
    tpu.vector_store %arg3[%c0_1, %c0_2], %0 {strides = array<i32>} : memref<1x2048xf32, #tpu.memory_space<vmem>>, vector<1x2048xf32>,
    return
  }
  func.func @transform_0(%arg0: i32, %arg1: i32) -> (i32, i32) {
    %c0_i32 = arith.constant 0 : i32
    return %arg0, %arg1 : i32, i32
  }
  func.func @transform_1(%arg0: i32, %arg1: i32) -> (i32, i32) {
    %c0_i32 = arith.constant 0 : i32
    return %arg0, %arg1 : i32, i32
  }
}

</mosaic_0001>

<llo_original>
// kernel: tpu_custom_call.1
$region0: #{tpu_custom_call.1}
  #allocation0 [shape = 'u32[]', space=smem, size = 0x4, offset = 0x4, fixed_abs, tag = 'smem constant byte address 0x4 - core index']
  #allocation1 [shape = 'u32[144,128]{1,0:T(1,128)}', space=vmem, size = 0x12000, scoped, tag = 'internal scratch']
  %s0 = inlined_call_operand.hbm [shape: f32[1,2048], index: 0, kind: input, shape index: {}, may-alias: {0,1}]
  %s1 = inlined_call_operand.hbm [shape: f32[1,2048], index: 1, kind: output, shape index: {}, may-alias: {0,1}]
  %s2 = sld [smem:[#allocation0]]
  $region18: #{tpu_custom_call.1} parent=0
    _
  %s4 = ssub.s32 1, %s2
  %s5 = scalar_select 0, %s4, %s2
  $region1: #{tpu_custom_call.1} parent=0
    #allocation2 [shape = 'u8[8192]{0}', space=vmem, size = 0x2000, scoped, tag = 'input window, operand 0, single buffered']
    #allocation3 [shape = 's32[1]{0}', space=sflag, size = 0x4, scoped, tag = 'scoped memory for tpu_custom_call.1']
    #allocation4 [shape = 's32[1]{0}', space=sflag, size = 0x4, scoped, tag = 'scoped memory for tpu_custom_call.1']
    #allocation5 [shape = 'u8[8192]{0}', space=vmem, size = 0x2000, scoped, tag = 'output window, operand 0, single buffered']
    %6 = vsyncpa [#allocation3], 0
    %7 = vsyncpa [#allocation4], 0
    // Predicated region
    $region2: #{tpu_custom_call.1} parent=1 // pred_check
      _
    $region3: #{tpu_custom_call.1} parent=1 // pred_check_branch
      %9 = sbr.rel (0) target = $region5
    $region4: #{tpu_custom_call.1} parent=1 // pred_region
      %s11 = ssub.s32 256, 256
      %12 = vsyncadd [#allocation3], %s11
      %s14 = sshll.u32 [#allocation2], 4
      %s15 = int_to_ptr.vmem [resolvable:$true] %s14
      %17 = dma.hbm_to_vmem [thread:$0]  %s0, 256, %s15, [#allocation3]
    $region5: #{tpu_custom_call.1} parent=1 // pred_fallthru
      _
    // Predicated region
    $region6: #{tpu_custom_call.1} parent=1 // pred_check
      _
    $region7: #{tpu_custom_call.1} parent=1 // pred_check_branch
      %19 = sbr.rel (0) target = $region9
    $region8: #{tpu_custom_call.1} parent=1 // pred_region
      %20 = dma.done [#allocation3], 256
    $region9: #{tpu_custom_call.1} parent=1 // pred_fallthru
      _
    %v21 = vld [vmem:[#allocation2] sm:$0xff]
    %v22 = vld [vmem:[#allocation2 + $0x8] sm:$0xff]
    %23 = vst [vmem:[#allocation5] sm:$0xff] %v21
    %24 = vst [vmem:[#allocation5 + $0x8] sm:$0xff] %v22
    // Predicated region
    $region10: #{tpu_custom_call.1} parent=1 // pred_check
      _
    $region11: #{tpu_custom_call.1} parent=1 // pred_check_branch
      %26 = sbr.rel (0) target = $region13
    $region12: #{tpu_custom_call.1} parent=1 // pred_region
      %s28 = ssub.s32 256, 256
      %29 = vsyncadd [#allocation4], %s28
      %s31 = sshll.u32 [#allocation5], 4
      %s32 = int_to_ptr.vmem [resolvable:$true] %s31
      %34 = dma.vmem_to_hbm [thread:$0]  %s32, 256, %s1, [#allocation4]
    $region13: #{tpu_custom_call.1} parent=1 // pred_fallthru
      _
    // Predicated region
    $region14: #{tpu_custom_call.1} parent=1 // pred_check
      _
    $region15: #{tpu_custom_call.1} parent=1 // pred_check_branch
      %36 = sbr.rel (0) target = $region17
    $region16: #{tpu_custom_call.1} parent=1 // pred_region
      %37 = dma.done [#allocation4], 256
    $region17: #{tpu_custom_call.1} parent=1 // pred_fallthru
      _
    %38 = vsyncpa [#allocation3], 1
    %39 = vsyncpa [#allocation4], 1

</llo_original>
